<compile_context>
chip_gen: v5e
topology: v5e:2x2
jax: 0.10.0
libtpu: 0.0.40
codegen_flags: <defaults>
</compile_context>

<pallas_src>
import functools

import jax
import jax.numpy as jnp
from jax.experimental import pallas as pl
from jax.experimental.pallas import tpu as pltpu


def _unpool_kernel(x_ref, b_ref, o_ref, *, stride: int):
    # x_ref: (tr, W)   b_ref: (W, W*stride)   o_ref: (tr, stride*stride*W)
    x = x_ref[...]
    b = b_ref[...]
    tr, W = x.shape
    Wo = W * stride

    # Width scatter on the MXU: B[j, stride*j] = 1 puts x[:, j] into column
    # stride*j and exact zeros elsewhere (bit-exact in f32 and bf16).
    xw = jnp.dot(x, b, preferred_element_type=x.dtype)          # (tr, Wo)

    # Height scatter: each input row expands to `stride` output rows, of which
    # rows 1..stride-1 are zero.  In the row-flattened output layout this is a
    # single lane-axis concat followed by one dense store.
    if stride > 1:
        tail = jnp.zeros((tr, (stride - 1) * Wo), dtype=x.dtype)
        out = jnp.concatenate([xw, tail], axis=-1)               # (tr, s*Wo)
    else:
        out = xw

    o_ref[...] = out.astype(o_ref.dtype)


def _choose_row_tile(total_rows: int, bytes_per_out_row: int,
                     cap_bytes: int = 4 << 20) -> int:
    """Largest row tile (multiple of 8, divisor of total_rows) whose output
    slab stays under cap_bytes, so double-buffered in+out tiles fit VMEM on
    all generations (incl. v7x's 64 MiB)."""
    cap_rows = max(8, cap_bytes // max(1, bytes_per_out_row))
    if total_rows <= cap_rows:
        return total_rows
    for t in range(min(cap_rows, total_rows), 7, -1):
        if total_rows % t == 0 and t % 8 == 0:
            return t
    return total_rows  # fallback: single block (correctness over tiling)


def unpool(x: jax.Array, stride: int = 2) -> jax.Array:
    """Pallas implementation of FCRN Unpool.forward for NCHW input."""
    N, C, H, W = x.shape
    Ho, Wo = H * stride, W * stride
    R = N * C * H                      # independent rows
    out_cols = stride * Wo             # stride^2 * W

    # Free (contiguous) reshape: rows of the feature maps.
    x_flat = x.reshape(R, W)

    # One-hot width-scatter matrix, resident across the whole grid.
    B = (jnp.arange(Wo, dtype=jnp.int32)[None, :]
         == stride * jnp.arange(W, dtype=jnp.int32)[:, None]).astype(x.dtype)

    itemsize = jnp.dtype(x.dtype).itemsize
    tr = _choose_row_tile(R, out_cols * itemsize)
    grid = (R // tr,)

    kernel = functools.partial(_unpool_kernel, stride=stride)
    out_flat = pl.pallas_call(
        kernel,
        out_shape=jax.ShapeDtypeStruct((R, out_cols), x.dtype),
        grid=grid,
        in_specs=[
            pl.BlockSpec((tr, W), lambda i: (i, 0)),
            pl.BlockSpec((W, Wo), lambda i: (0, 0)),   # constant, stays resident
        ],
        out_specs=pl.BlockSpec((tr, out_cols), lambda i: (i, 0)),
        compiler_params=pltpu.CompilerParams(
            dimension_semantics=("parallel",),
            vmem_limit_bytes=32 * 1024 * 1024,
        ),
    )(x_flat, B)

    # Free (contiguous) regroup back to NCHW.
    return out_flat.reshape(N, C, Ho, Wo)


if __name__ == "__main__":
    key = jax.random.PRNGKey(0)
    N, C, H, W = 2, 4, 16, 16
    stride = 2
    x = jax.random.normal(key, (N, C, H, W), dtype=jnp.float32)

    out = jax.jit(functools.partial(unpool, stride=stride))(x)
    out = jax.block_until_ready(out)

    # Reference (plain JAX) check of conv_transpose2d-with-one-hot semantics.
    expected = jnp.zeros((N, C, H * stride, W * stride), dtype=x.dtype)
    expected = expected.at[:, :, ::stride, ::stride].set(x)

    assert out.shape == (N, C, H * stride, W * stride)
    assert out.dtype == x.dtype
    assert jnp.allclose(out, expected, atol=0.0, rtol=0.0)

    print("KERNEL_OK")
</pallas_src>

<mosaic_0001>
module attributes {stable_mosaic.version = 11 : i64} {
  func.func @_unpool_kernel(%arg0: i32, %arg1: memref<128x16xf32, #tpu.memory_space<vmem>>, %arg2: memref<16x32xf32, #tpu.memory_space<vmem>>, %arg3: memref<128x64xf32, #tpu.memory_space<vmem>>) attributes {dimension_semantics = [#tpu.dimension_semantics<parallel>], iteration_bounds = array<i64: 1>, scalar_prefetch = 0 : i64, scratch_operands = 0 : i64, tpu.core_type = #tpu.core_type<tc>, window_params = [{transform_indices = @transform_0, window_bounds = array<i64: 128, 16>}, {pipeline_mode = #tpu.pipeline_mode<synchronous>, transform_indices = @transform_1, window_bounds = array<i64: 16, 32>}, {transform_indices = @transform_2, window_bounds = array<i64: 128, 64>}]} {
    %c0 = arith.constant 0 : index
    %c0_0 = arith.constant 0 : index
    %0 = vector.load %arg1[%c0, %c0_0] : memref<128x16xf32, #tpu.memory_space<vmem>>, vector<128x16xf32>
    %c0_1 = arith.constant 0 : index
    %c0_2 = arith.constant 0 : index
    %1 = vector.load %arg2[%c0_1, %c0_2] : memref<16x32xf32, #tpu.memory_space<vmem>>, vector<16x32xf32>
    %cst = arith.constant dense<0.000000e+00> : vector<128x32xf32>
    %2 = tpu.matmul %0, %1, %cst {dimension_numbers = #tpu.dot_dimension_numbers<[1], [0], [0], [1], [0, 0, 1, 1], [], []>} : vector<128x16xf32>, vector<16x32xf32>, vector<128x32xf32> -> vector<128x32xf32>
    %cst_3 = arith.constant 0.000000e+00 : f32
    %3 = vector.broadcast %cst_3 : f32 to vector<128x32xf32>
    %4 = tpu.concatenate %2, %3 in 1 : vector<128x32xf32>, vector<128x32xf32> -> vector<128x64xf32>
    %c0_4 = arith.constant 0 : index
    %c0_5 = arith.constant 0 : index
    %5 = vector.load %arg3[%c0_4, %c0_5] : memref<128x64xf32, #tpu.memory_space<vmem>>, vector<128x64xf32>
    tpu.vector_store %arg3[%c0_4, %c0_5], %4 {strides = array<i32>} : memref<128x64xf32, #tpu.memory_space<vmem>>, vector<128x64xf32>,
    return
  }
  func.func @transform_0(%arg0: i32) -> (i32, i32) {
    %c0_i32 = arith.constant 0 : i32
    %c0_i32_0 = arith.constant 0 : i32
    return %arg0, %c0_i32 : i32, i32
  }
  func.func @transform_1(%arg0: i32) -> (i32, i32) {
    %c0_i32 = arith.constant 0 : i32
    %c0_i32_0 = arith.constant 0 : i32
    %c0_i32_1 = arith.constant 0 : i32
    return %c0_i32, %c0_i32_0 : i32, i32
  }
  func.func @transform_2(%arg0: i32) -> (i32, i32) {
    %c0_i32 = arith.constant 0 : i32
    %c0_i32_0 = arith.constant 0 : i32
    return %arg0, %c0_i32 : i32, i32
  }
}

</mosaic_0001>

<llo_original>
// kernel: unpool.1
$region0: #{unpool.1}
  #allocation0 [shape = 'u32[]', space=smem, size = 0x4, offset = 0x4, fixed_abs, tag = 'smem constant byte address 0x4 - core index']
  #allocation1 [shape = 'u32[72,128]{1,0:T(1,128)}', space=vmem, size = 0x9000, scoped, tag = 'internal scratch']
  %s0 = inlined_call_operand.hbm [shape: f32[128,16], index: 0, kind: input, shape index: {}]
  %s1 = inlined_call_operand.vmem [shape: f32[16,32], index: 1, kind: input, shape index: {}]
  %s2 = inlined_call_operand.vmem [shape: f32[128,64], index: 2, kind: output, shape index: {}]
  %s3 = sld [smem:[#allocation0]]
  $region22: #{unpool.1} parent=0
    _
  %s5 = ssub.s32 1, %s3
  %s6 = scalar_select 0, %s5, %s3
  $region1: #{unpool.1} parent=0
    #allocation2 [shape = 'u8[65536]{0}', space=vmem, size = 0x10000, scoped, tag = 'input window, operand 0, single buffered']
    #allocation3 [shape = 's32[1]{0}', space=sflag, size = 0x4, scoped, tag = 'scoped memory for unpool.1']
    %7 = vsyncpa [#allocation3], 0
    // Predicated region
    $region2: #{unpool.1} parent=1 // pred_check
      _
    $region3: #{unpool.1} parent=1 // pred_check_branch
      %9 = sbr.rel (0) target = $region5
    $region4: #{unpool.1} parent=1 // pred_region
      %11 = vsyncadd [#allocation3], 0
      %s12 = sshll.u32 %s0, 4
      %s13 = int_to_ptr.hbm [resolvable:$true] %s12
      %s14 = sshll.u32 [#allocation2], 4
      %s15 = int_to_ptr.vmem [resolvable:$true] %s14
      %20 = dma.hbm_to_vmem [thread:$0]  %s13, 2048, %s15, [#allocation3], 128, 128, 8
    $region5: #{unpool.1} parent=1 // pred_fallthru
      _
    // Predicated region
    $region6: #{unpool.1} parent=1 // pred_check
      _
    $region7: #{unpool.1} parent=1 // pred_check_branch
      %22 = sbr.rel (0) target = $region9
    $region8: #{unpool.1} parent=1 // pred_region
      _
    $region9: #{unpool.1} parent=1 // pred_fallthru
      _
    // Predicated region
    $region10: #{unpool.1} parent=1 // pred_check
      _
    $region11: #{unpool.1} parent=1 // pred_check_branch
      %24 = sbr.rel (0) target = $region13
    $region12: #{unpool.1} parent=1 // pred_region
      %26 = dma.done [#allocation3], 2048
    $region13: #{unpool.1} parent=1 // pred_fallthru
      _
    %v27 = vld [vmem:[#allocation2] sm:$0xff]
    %v28 = vld [vmem:[#allocation2 + $0x8] sm:$0xff]
    %v29 = vld [vmem:[#allocation2 + $0x10] sm:$0xff]
    %v30 = vld [vmem:[#allocation2 + $0x18] sm:$0xff]
    %v31 = vld [vmem:[#allocation2 + $0x20] sm:$0xff]
    %v32 = vld [vmem:[#allocation2 + $0x28] sm:$0xff]
    %v33 = vld [vmem:[#allocation2 + $0x30] sm:$0xff]
    %v34 = vld [vmem:[#allocation2 + $0x38] sm:$0xff]
    %v35 = vld [vmem:[#allocation2 + $0x40] sm:$0xff]
    %v36 = vld [vmem:[#allocation2 + $0x48] sm:$0xff]
    %v37 = vld [vmem:[#allocation2 + $0x50] sm:$0xff]
    %v38 = vld [vmem:[#allocation2 + $0x58] sm:$0xff]
    %v39 = vld [vmem:[#allocation2 + $0x60] sm:$0xff]
    %v40 = vld [vmem:[#allocation2 + $0x68] sm:$0xff]
    %v41 = vld [vmem:[#allocation2 + $0x70] sm:$0xff]
    %v42 = vld [vmem:[#allocation2 + $0x78] sm:$0xff]
    %v43 = vld [vmem:[%s1] sm:$0xff]
    %v44 = vld [vmem:[%s1 + $0x8] sm:$0xff]
    %vm45 = vcmask 130048
    %v47 = vsel %vm45, %v27, 0
    %v50 = vsel %vm45, %v28, 0
    %v53 = vsel %vm45, %v29, 0
    %v56 = vsel %vm45, %v30, 0
    %v59 = vsel %vm45, %v31, 0
    %v62 = vsel %vm45, %v32, 0
    %v65 = vsel %vm45, %v33, 0
    %v68 = vsel %vm45, %v34, 0
    %v71 = vsel %vm45, %v35, 0
    %v74 = vsel %vm45, %v36, 0
    %v77 = vsel %vm45, %v37, 0
    %v80 = vsel %vm45, %v38, 0
    %v83 = vsel %vm45, %v39, 0
    %v86 = vsel %vm45, %v40, 0
    %v89 = vsel %vm45, %v41, 0
    %v92 = vsel %vm45, %v42, 0
    %94 = vmatpush.msra.mxu0 0.0
    %95 = vmatpush.msra.mxu0 0.0
    %96 = vmatpush.msra.mxu0 0.0
    %97 = vmatpush.msra.mxu0 0.0
    %98 = vmatpush.msra.mxu0 0.0
    %99 = vmatpush.msra.mxu0 0.0
    %100 = vmatpush.msra.mxu0 0.0
    %101 = vmatpush.msra.mxu0 0.0
    %102 = vmatpush.msra.mxu0 0.0
    %103 = vmatpush.msra.mxu0 0.0
    %104 = vmatpush.msra.mxu0 0.0
    %105 = vmatpush.msra.mxu0 0.0
    %106 = vmatpush.msra.mxu0 0.0
    %107 = vmatpush.msra.mxu0 0.0
    %108 = vmatpush.msra.mxu0 %v44
    %109 = vmatpush.msra.mxu0 %v43
    %110 = vmatmul.f32.gmra.mxu0 %v47
    %v111 = vpop.f32.mrf.mxu0
    %v112 = vadd.f32 0.0, %v111
    %113 = vmatmul.f32.gmra.mxu0 %v50
    %v114 = vpop.f32.mrf.mxu0
    %v115 = vadd.f32 0.0, %v114
    %116 = vmatmul.f32.gmra.mxu0 %v53
    %v117 = vpop.f32.mrf.mxu0
    %v118 = vadd.f32 0.0, %v117
    %119 = vmatmul.f32.gmra.mxu0 %v56
    %v120 = vpop.f32.mrf.mxu0
    %v121 = vadd.f32 0.0, %v120
    %122 = vmatmul.f32.gmra.mxu0 %v59
    %v123 = vpop.f32.mrf.mxu0
    %v124 = vadd.f32 0.0, %v123
    %125 = vmatmul.f32.gmra.mxu0 %v62
    %v126 = vpop.f32.mrf.mxu0
    %v127 = vadd.f32 0.0, %v126
    %128 = vmatmul.f32.gmra.mxu0 %v65
    %v129 = vpop.f32.mrf.mxu0
    %v130 = vadd.f32 0.0, %v129
    %131 = vmatmul.f32.gmra.mxu0 %v68
    %v132 = vpop.f32.mrf.mxu0
    %v133 = vadd.f32 0.0, %v132
    %134 = vmatmul.f32.gmra.mxu0 %v71
    %v135 = vpop.f32.mrf.mxu0
    %v136 = vadd.f32 0.0, %v135
    %137 = vmatmul.f32.gmra.mxu0 %v74
    %v138 = vpop.f32.mrf.mxu0
    %v139 = vadd.f32 0.0, %v138
    %140 = vmatmul.f32.gmra.mxu0 %v77
    %v141 = vpop.f32.mrf.mxu0
    %v142 = vadd.f32 0.0, %v141
    %143 = vmatmul.f32.gmra.mxu0 %v80
    %v144 = vpop.f32.mrf.mxu0
    %v145 = vadd.f32 0.0, %v144
    %146 = vmatmul.f32.gmra.mxu0 %v83
    %v147 = vpop.f32.mrf.mxu0
    %v148 = vadd.f32 0.0, %v147
    %149 = vmatmul.f32.gmra.mxu0 %v86
    %v150 = vpop.f32.mrf.mxu0
    %v151 = vadd.f32 0.0, %v150
    %152 = vmatmul.f32.gmra.mxu0 %v89
    %v153 = vpop.f32.mrf.mxu0
    %v154 = vadd.f32 0.0, %v153
    %155 = vmatmul.f32.gmra.mxu0 %v92
    %v156 = vpop.f32.mrf.mxu0
    %v157 = vadd.f32 0.0, %v156
    %158 = vdwg.mxu0
    %vm159 = vcmask 261120
    %v160 = vsel %vm159, %v112, 0.0
    %v161 = vsel %vm159, %v115, 0.0
    %v162 = vsel %vm159, %v118, 0.0
    %v163 = vsel %vm159, %v121, 0.0
    %v164 = vsel %vm159, %v124, 0.0
    %v165 = vsel %vm159, %v127, 0.0
    %v166 = vsel %vm159, %v130, 0.0
    %v167 = vsel %vm159, %v133, 0.0
    %v168 = vsel %vm159, %v136, 0.0
    %v169 = vsel %vm159, %v139, 0.0
    %v170 = vsel %vm159, %v142, 0.0
    %v171 = vsel %vm159, %v145, 0.0
    %v172 = vsel %vm159, %v148, 0.0
    %v173 = vsel %vm159, %v151, 0.0
    %v174 = vsel %vm159, %v154, 0.0
    %v175 = vsel %vm159, %v157, 0.0
    %vm176 = vcmask 523264
    %177 = vst.msk [vmem:[%s2] sm:$0xff] %vm176, %v160
    %178 = vst.msk [vmem:[%s2 + $0x8] sm:$0xff] %vm176, %v161
    %179 = vst.msk [vmem:[%s2 + $0x10] sm:$0xff] %vm176, %v162
    %180 = vst.msk [vmem:[%s2 + $0x18] sm:$0xff] %vm176, %v163
    %181 = vst.msk [vmem:[%s2 + $0x20] sm:$0xff] %vm176, %v164
    %182 = vst.msk [vmem:[%s2 + $0x28] sm:$0xff] %vm176, %v165
    %183 = vst.msk [vmem:[%s2 + $0x30] sm:$0xff] %vm176, %v166
    %184 = vst.msk [vmem:[%s2 + $0x38] sm:$0xff] %vm176, %v167
    %185 = vst.msk [vmem:[%s2 + $0x40] sm:$0xff] %vm176, %v168
    %186 = vst.msk [vmem:[%s2 + $0x48] sm:$0xff] %vm176, %v169
    %187 = vst.msk [vmem:[%s2 + $0x50] sm:$0xff] %vm176, %v170
    %188 = vst.msk [vmem:[%s2 + $0x58] sm:$0xff] %vm176, %v171
    %189 = vst.msk [vmem:[%s2 + $0x60] sm:$0xff] %vm176, %v172
    %190 = vst.msk [vmem:[%s2 + $0x68] sm:$0xff] %vm176, %v173
    %191 = vst.msk [vmem:[%s2 + $0x70] sm:$0xff] %vm176, %v174
    %192 = vst.msk [vmem:[%s2 + $0x78] sm:$0xff] %vm176, %v175
    // Predicated region
    $region14: #{unpool.1} parent=1 // pred_check
      _
    $region15: #{unpool.1} parent=1 // pred_check_branch
      %194 = sbr.rel (0) target = $region17
    $region16: #{unpool.1} parent=1 // pred_region
      _
    $region17: #{unpool.1} parent=1 // pred_fallthru
      _
    // Predicated region
    $region18: #{unpool.1} parent=1 // pred_check
      _
    $region19: #{unpool.1} parent=1 // pred_check_branch
      %196 = sbr.rel (0) target = $region21
    $region20: #{unpool.1} parent=1 // pred_region
      _
    $region21: #{unpool.1} parent=1 // pred_fallthru
      _
    %197 = vsyncpa [#allocation3], 1

</llo_original>
